<compile_context>
chip_gen: v7x
topology: tpu7x:2x2x1
jax: 0.10.0
libtpu: 0.0.40
codegen_flags: <defaults>
</compile_context>

<pallas_src>
import numpy as np
import jax
import jax.numpy as jnp
from jax import lax
from jax.experimental import pallas as pl
from jax.experimental.pallas import tpu as pltpu


def get_sinusoid_encoding_table(positions, d_hid, T=1000):
    """Exact replica of the torch helper (returns float32 numpy array)."""
    if isinstance(positions, int):
        positions = list(range(positions))

    def cal_angle(position, hid_idx):
        return position / np.power(T, 2 * (hid_idx // 2) / d_hid)

    def get_posi_angle_vec(position):
        return [cal_angle(position, hid_j) for hid_j in range(d_hid)]

    sinusoid_table = np.array([get_posi_angle_vec(pos_i) for pos_i in positions])
    sinusoid_table[:, 0::2] = np.sin(sinusoid_table[:, 0::2])
    sinusoid_table[:, 1::2] = np.cos(sinusoid_table[:, 1::2])
    return sinusoid_table.astype(np.float32)


def decode_kernel(r_ref, e_ref, yx_ref, o_ref):
    # r_ref : (tile_n, C)    gathered rows of (sin_table @ Wt + bias) for this tile
    # e_ref : (C, C*P)       constant 0/1 expansion matrix, E[c, c*P + p] = 1
    # yx_ref: (1, C*P)       x[b] @ Wt flattened in (c, p) order (per-sample, resident)
    # o_ref : (tile_n, C*P)  o[t, c*P + p] = r[t, c] + yx[c*P + p]
    #
    # Each E column has exactly one 1, so the MXU expansion dot is exact (no
    # accumulation error) and avoids an unaligned reshape relayout in VMEM.
    r_exp = jnp.dot(r_ref[...], e_ref[...], preferred_element_type=jnp.float32)
    o_ref[...] = r_exp + yx_ref[...]


def decoder_all_sentinel_forward(x, attentions, dates, weight, bias, sin_table,
                                 threshold=0.25, tile_n_cap=512):
    """Mirrors DecoderAllSentinel.forward (threshold is unused, as in torch)."""
    del attentions, threshold  # attentions only sets the mask length; mask is all-ones

    dates_np = np.asarray(dates)
    x = jnp.asarray(x, dtype=jnp.float32)                  # (B, P, D)
    weight = jnp.asarray(weight, dtype=jnp.float32)        # (C, D)
    bias = jnp.asarray(bias, dtype=jnp.float32)            # (C,)
    sin_np = np.asarray(sin_table, dtype=np.float32)       # (T, D)
    B, P, D = x.shape
    C = int(bias.shape[0])
    T = int(sin_np.shape[0])
    CP = C * P

    # torch's nn.Embedding raises on out-of-range indices; jnp.take would clamp
    # silently, so enforce the same contract explicitly.
    assert dates_np.min() >= 0 and dates_np.max() < T, "dates index out of range"

    # Data-dependent lengths: torch uses nonzero(dates[i] != 0)[-1] as an EXCLUSIVE
    # end (the last valid timestep is intentionally dropped) -- match it exactly.
    # An all-zero dates row raises, exactly like the torch code would.
    # TODO(synk): this .item()-style length loop and the ragged per-sample packing
    # below stay as host/XLA glue; distinct length tuples retrace the wrapper.
    lengths = [int(np.nonzero(dates_np[i] != 0)[0][-1]) for i in range(B)]
    Lmax = max(lengths)

    b_idx = np.concatenate([np.full((L,), i, dtype=np.int32)
                            for i, L in enumerate(lengths)])
    t_idx = np.concatenate([np.arange(L, dtype=np.int32) for L in lengths])

    # Tile the time axis: cap the tile at the padded Lmax (no padded work for short
    # sequences) and size tiles to minimise padding for long ones.
    Lp0 = max(8, ((Lmax + 7) // 8) * 8)
    cap = max(8, (int(tile_n_cap) // 8) * 8)
    tiles = max(1, -(-Lp0 // cap))                 # ceil(Lp0 / cap)
    tile_n = ((-(-Lp0 // tiles) + 7) // 8) * 8     # ceil(Lp0 / tiles), 8-aligned
    Lp = tiles * tile_n

    # Per-sample padded date indices (pad with 0 -> row 0 of the table; sliced off later).
    dpad = np.zeros((B, Lp), dtype=np.int32)
    for i, L in enumerate(lengths):
        dpad[i, :L] = dates_np[i, :L]

    # ---- One-time device-side precompute (tiny, hoisted out of the hot loop) ----
    hi = lax.Precision.HIGHEST
    wt = jnp.transpose(weight)                                          # (D, C)
    r_table = jnp.dot(jnp.asarray(sin_np), wt, precision=hi) + bias     # (T, C)
    r = jnp.take(r_table, jnp.asarray(dpad), axis=0)                    # (B, Lp, C)
    yx = jnp.einsum('bpd,dc->bpc', x, wt, precision=hi)                 # (B, P, C)
    yx_cp = jnp.transpose(yx, (0, 2, 1)).reshape(B, 1, CP)              # (B, 1, C*P), c*P+p order

    # Constant 0/1 expansion matrix: E[c, c*P + p] = 1.
    e_np = np.zeros((C, CP), dtype=np.float32)
    for c in range(C):
        e_np[c, c * P:(c + 1) * P] = 1.0
    e = jnp.asarray(e_np)

    flops = 2 * B * Lp * C * CP + B * Lp * CP
    bytes_accessed = 4 * (B * Lp * C + C * CP + B * CP + B * Lp * CP)

    out = pl.pallas_call(
        decode_kernel,
        out_shape=jax.ShapeDtypeStruct((B, Lp, CP), jnp.float32),
        grid=(B, tiles),
        in_specs=[
            pl.BlockSpec((None, tile_n, C), lambda b, t: (b, t, 0)),    # gathered r rows
            pl.BlockSpec((C, CP), lambda b, t: (0, 0)),                 # E (resident)
            pl.BlockSpec((None, 1, CP), lambda b, t: (b, 0, 0)),        # yx[b] (resident over t)
        ],
        out_specs=pl.BlockSpec((None, tile_n, CP), lambda b, t: (b, t, 0)),
        compiler_params=pltpu.CompilerParams(
            dimension_semantics=("parallel", "parallel"),
            vmem_limit_bytes=32 * 1024 * 1024,
        ),
        cost_estimate=pl.CostEstimate(flops=flops, transcendentals=0,
                                      bytes_accessed=bytes_accessed),
    )(r, e, yx_cp)

    # Epilogue: drop per-sample padding, pack over the batch, reshape to (N, C, P).
    # Because the kernel stores rows flattened as c*P + p, this is slice + concat +
    # reshape only -- no output-sized transpose pass.
    # TODO(synk): packing could be folded into the kernel's out index_map via
    # scalar-prefetched cumulative offsets; kept in XLA for simplicity/robustness.
    recons = jnp.concatenate([out[i, :L] for i, L in enumerate(lengths)], axis=0)  # (N, C*P)
    recons = recons.reshape(-1, C, P)                                               # (N, C, P)
    masks = jnp.asarray(np.stack([b_idx, t_idx], axis=1).astype(np.int32))
    return recons, masks


if __name__ == "__main__":
    # module config (defaults): in_channels=10, inter_dim=[], embed_dim=128, T=367
    B, P, D, C, Tmax, T = 2, 4, 128, 10, 12, 367

    key = jax.random.PRNGKey(0)
    k_x, k_w, k_b, k_d, k_a = jax.random.split(key, 5)

    x = jax.random.normal(k_x, (B, P, D), dtype=jnp.float32)
    attentions = jax.random.normal(k_a, (B, Tmax), dtype=jnp.float32)

    # deterministic "parameters" for nn.Linear(embed_dim, in_channels)
    weight = (jax.random.normal(k_w, (C, D), dtype=jnp.float32) / np.sqrt(D)).astype(jnp.float32)
    bias = (0.01 * jax.random.normal(k_b, (C,), dtype=jnp.float32)).astype(jnp.float32)
    sin_table = get_sinusoid_encoding_table(T, D, T=T)   # frozen nn.Embedding table (T, D)

    # dates: nonzero leading entries, zeros afterwards (per-sample variable length)
    dates = np.array(jax.random.randint(k_d, (B, Tmax), 1, T), dtype=np.int32)
    valid = [9, 7]
    for i in range(B):
        dates[i, valid[i]:] = 0

    recons, masks = decoder_all_sentinel_forward(x, attentions, dates,
                                                 weight, bias, sin_table)
    recons = jax.block_until_ready(recons)
    masks = jax.block_until_ready(masks)

    # pure numpy reference of the torch forward (un-folded order of operations)
    x_np = np.asarray(x); w_np = np.asarray(weight); b_np = np.asarray(bias)
    ref_recons, ref_masks = [], []
    for i in range(B):
        L = int(np.nonzero(dates[i] != 0)[0][-1])
        pe_i = sin_table[dates[i, :L]]                             # (L, D)
        x_i = x_np[i][:, None, :] + pe_i[None, :, :]               # (P, L, D)
        ref_recons.append(x_i @ w_np.T + b_np)                     # (P, L, C)
        m = np.zeros((L, 2), dtype=np.int32); m[:, 0] = i; m[:, 1] = np.arange(L)
        ref_masks.append(m)
    ref_recons = np.concatenate(ref_recons, axis=1).transpose(1, 2, 0)  # (N, C, P)
    ref_masks = np.concatenate(ref_masks, axis=0)

    assert recons.shape == ref_recons.shape, (recons.shape, ref_recons.shape)
    # 1e-2 tolerance documents the linearity fold ((x+pe)@W vs x@W + pe@W) and any
    # MXU accumulation-order difference; observed error is far smaller in practice.
    np.testing.assert_allclose(np.asarray(recons), ref_recons, rtol=1e-2, atol=1e-2)
    np.testing.assert_array_equal(np.asarray(masks), ref_masks)

    print("KERNEL_OK")
</pallas_src>

<mosaic_0001>
module attributes {stable_mosaic.version = 11 : i64} {
  func.func @decode_kernel(%arg0: i32, %arg1: i32, %arg2: memref<1x8x10xf32, #tpu.memory_space<vmem>>, %arg3: memref<10x40xf32, #tpu.memory_space<vmem>>, %arg4: memref<1x1x40xf32, #tpu.memory_space<vmem>>, %arg5: memref<1x8x40xf32, #tpu.memory_space<vmem>>) attributes {dimension_semantics = [#tpu.dimension_semantics<parallel>, #tpu.dimension_semantics<parallel>], iteration_bounds = array<i64: 2, 1>, scalar_prefetch = 0 : i64, scratch_operands = 0 : i64, tpu.core_type = #tpu.core_type<tc>, window_params = [{transform_indices = @transform_0, window_bounds = array<i64: 1, 8, 10>}, {pipeline_mode = #tpu.pipeline_mode<synchronous>, transform_indices = @transform_1, window_bounds = array<i64: 10, 40>}, {transform_indices = @transform_2, window_bounds = array<i64: 1, 1, 40>}, {transform_indices = @transform_3, window_bounds = array<i64: 1, 8, 40>}]} {
    %c0 = arith.constant 0 : index
    %c0_0 = arith.constant 0 : index
    %c0_1 = arith.constant 0 : index
    %0 = vector.load %arg2[%c0, %c0_0, %c0_1] : memref<1x8x10xf32, #tpu.memory_space<vmem>>, vector<1x8x10xf32>
    %1 = vector.shape_cast %0 : vector<1x8x10xf32> to vector<8x10xf32>
    %c0_2 = arith.constant 0 : index
    %c0_3 = arith.constant 0 : index
    %2 = vector.load %arg3[%c0_2, %c0_3] : memref<10x40xf32, #tpu.memory_space<vmem>>, vector<10x40xf32>
    %cst = arith.constant dense<0.000000e+00> : vector<8x40xf32>
    %3 = tpu.matmul %1, %2, %cst {dimension_numbers = #tpu.dot_dimension_numbers<[1], [0], [0], [1], [0, 0, 1, 1], [], []>} : vector<8x10xf32>, vector<10x40xf32>, vector<8x40xf32> -> vector<8x40xf32>
    %c0_4 = arith.constant 0 : index
    %c0_5 = arith.constant 0 : index
    %c0_6 = arith.constant 0 : index
    %4 = vector.load %arg4[%c0_4, %c0_5, %c0_6] : memref<1x1x40xf32, #tpu.memory_space<vmem>>, vector<1x1x40xf32>
    %5 = vector.shape_cast %4 : vector<1x1x40xf32> to vector<1x40xf32>
    %6 = vector.broadcast %5 : vector<1x40xf32> to vector<8x40xf32>
    %7 = arith.addf %3, %6 : vector<8x40xf32>
    %c0_7 = arith.constant 0 : index
    %c0_8 = arith.constant 0 : index
    %c0_9 = arith.constant 0 : index
    %8 = vector.load %arg5[%c0_7, %c0_8, %c0_9] : memref<1x8x40xf32, #tpu.memory_space<vmem>>, vector<1x8x40xf32>
    %9 = vector.shape_cast %8 : vector<1x8x40xf32> to vector<8x40xf32>
    %10 = vector.shape_cast %7 : vector<8x40xf32> to vector<1x8x40xf32>
    tpu.vector_store %arg5[%c0_7, %c0_8, %c0_9], %10 {strides = array<i32>} : memref<1x8x40xf32, #tpu.memory_space<vmem>>, vector<1x8x40xf32>,
    return
  }
  func.func @transform_0(%arg0: i32, %arg1: i32) -> (i32, i32, i32) {
    %c0_i32 = arith.constant 0 : i32
    %c0_i32_0 = arith.constant 0 : i32
    return %arg0, %arg1, %c0_i32 : i32, i32, i32
  }
  func.func @transform_1(%arg0: i32, %arg1: i32) -> (i32, i32) {
    %c0_i32 = arith.constant 0 : i32
    %c0_i32_0 = arith.constant 0 : i32
    %c0_i32_1 = arith.constant 0 : i32
    return %c0_i32, %c0_i32_0 : i32, i32
  }
  func.func @transform_2(%arg0: i32, %arg1: i32) -> (i32, i32, i32) {
    %c0_i32 = arith.constant 0 : i32
    %c0_i32_0 = arith.constant 0 : i32
    %c0_i32_1 = arith.constant 0 : i32
    return %arg0, %c0_i32, %c0_i32_0 : i32, i32, i32
  }
  func.func @transform_3(%arg0: i32, %arg1: i32) -> (i32, i32, i32) {
    %c0_i32 = arith.constant 0 : i32
    %c0_i32_0 = arith.constant 0 : i32
    return %arg0, %arg1, %c0_i32 : i32, i32, i32
  }
}

</mosaic_0001>

<llo_original>
// kernel: tpu_custom_call.1
$region0: #{tpu_custom_call.1}
  #allocation0 [shape = 'u32[]', space=smem, size = 0x4, offset = 0x4, fixed_abs, tag = 'smem constant byte address 0x4 - core index']
  #allocation1 [shape = 'u32[144,128]{1,0:T(1,128)}', space=vmem, size = 0x12000, scoped, tag = 'internal scratch']
  %s0 = inlined_call_operand.hbm [shape: f32[2,8,10], index: 0, kind: input, shape index: {}]
  %s1 = inlined_call_operand.hbm [shape: f32[10,40], index: 1, kind: input, shape index: {}]
  %s2 = inlined_call_operand.vmem [shape: f32[2,1,40], index: 2, kind: input, shape index: {}]
  %s3 = inlined_call_operand.hbm [shape: f32[2,8,40], index: 3, kind: output, shape index: {}]
  %s4 = sld [smem:[#allocation0]]
  $region53: #{tpu_custom_call.1} parent=0
    _
  %s6 = ssub.s32 1, %s4
  %s7 = scalar_select 0, %s6, %s4
  $region1: #{tpu_custom_call.1} parent=0
    #allocation2 [shape = 'u8[8192]{0}', space=vmem, size = 0x2000, scoped, tag = 'input window, operand 0']
    #allocation3 [shape = 's32[2]{0}', space=sflag, size = 0x8, scoped, tag = 'scoped memory for tpu_custom_call.1']
    #allocation4 [shape = 's32[2]{0}', space=sflag, size = 0x8, scoped, tag = 'scoped memory for tpu_custom_call.1']
    #allocation5 [shape = 'u8[8192]{0}', space=vmem, size = 0x2000, scoped, tag = 'input window, operand 1, single buffered']
    #allocation6 [shape = 's32[1]{0}', space=sflag, size = 0x4, scoped, tag = 'scoped memory for tpu_custom_call.1']
    #allocation7 [shape = 'u8[8192]{0}', space=vmem, size = 0x2000, scoped, tag = 'output window, operand 0']
    %8 = vsyncpa [#allocation3], 0
    %s9 = scalar_lea.sflag [#allocation3], 1
    %10 = vsyncpa %s9, 0
    %11 = vsyncpa [#allocation6], 0
    %12 = vsyncpa [#allocation4], 0
    %s13 = scalar_lea.sflag [#allocation4], 1
    %14 = vsyncpa %s13, 0
    loop: start=0, step=1, limit=4
    $region2: #{tpu_custom_call.1} parent=1 // loop_pre_header
      _
    $region3: #{tpu_custom_call.1} parent=1 // loop_header
      %s16 = sphi 0, %s20
      %p17 = scmp.ge.s32.totalorder %s16, 4
      %s23 = sphi 0, %s35
      %s24 = sphi 0, %s31
      %s25 = sphi 0, %s23
      %s26 = sphi 0, %s24
      %s27 = sphi 0, %s25
      %s28 = sphi 0, %s26
      %s40 = sphi 0, %s42
      %s43 = sphi 0, %s40
      %s44 = sphi 0, %s43
      %s60 = sphi 0, %s44
      %s64 = sphi 0, %s64
      %s66 = sphi 0, %s64
      %s67 = sphi 0, %s66
      %s81 = sphi 0, %s67
      %s87 = sphi 0, %s89
      %s90 = sphi 0, %s87
      %s91 = sphi 0, %s90
      %s107 = sphi 0, %s91
      %s115 = sphi 0, %s117
      %s118 = sphi 0, %s115
      %s119 = sphi 0, %s118
      %s135 = sphi 0, %s119
    $region4: #{tpu_custom_call.1} parent=1 // loop_header_branch
      %19 = sbr.rel (%p17) target = $region8
    $region5: #{tpu_custom_call.1} parent=1 // loop_body
      %s21 = ssub.s32 %s16, 1
      %s22 = ssub.s32 %s16, 2
      %s29 = sadd.s32 1, %s24
      %p30 = scmp.ge.s32.totalorder %s29, 1
      %s31 = scalar_select %p30, 0, %s29
      %s32 = sadd.s32 1, %s23
      %s33 = scalar_select %p30, %s32, %s23
      %p34 = scmp.ge.s32.totalorder %s33, 2
      %s35 = scalar_select %p34, 0, %s33
      %s36 = ssub.s32 %s23, %s35
      %s37 = ssub.s32 %s24, %s31
      %s38 = sor.u32 %s36, %s37
      %p39 = scmp.eq.s32.totalorder %s38, 0
      %s41 = sadd.s32 %s40, 1
      %s42 = scalar_select %p39, %s40, %s41
      %p45 = pneg %p39
      %p46 = scmp.eq.s32.totalorder %s16, 1
      %p47 = por %p45, %p46
      %p48 = scmp.ne.s32.totalorder %s40, %s43
      %p49 = scmp.eq.s32.totalorder %s16, 0
      %p50 = por %p48, %p49
      %p51 = scmp.ne.s32.totalorder %s40, %s43
      %p52 = scmp.eq.s32.totalorder %s21, 1
      %p53 = por %p51, %p52
      %p54 = scmp.ne.s32.totalorder %s43, %s44
      %p55 = scmp.eq.s32.totalorder %s21, 0
      %p56 = por %p54, %p55
      %p57 = scmp.ne.s32.totalorder %s43, %s44
      %p58 = scmp.eq.s32.totalorder %s22, 1
      %p59 = por %p57, %p58
      %p61 = scmp.ne.s32.totalorder %s44, %s60
      %p62 = scmp.eq.s32.totalorder %s22, 0
      %p63 = por %p61, %p62
      %s65 = sadd.s32 %s64, 1
      %p68 = scmp.eq.s32.totalorder %s16, 1
      %p69 = scmp.ne.s32.totalorder %s64, %s66
      %p70 = scmp.eq.s32.totalorder %s16, 0
      %p71 = por %p69, %p70
      %p72 = scmp.ne.s32.totalorder %s64, %s66
      %p73 = scmp.eq.s32.totalorder %s21, 1
      %p74 = por %p72, %p73
      %p75 = scmp.ne.s32.totalorder %s66, %s67
      %p76 = scmp.eq.s32.totalorder %s21, 0
      %p77 = por %p75, %p76
      %p78 = scmp.ne.s32.totalorder %s66, %s67
      %p79 = scmp.eq.s32.totalorder %s22, 1
      %p80 = por %p78, %p79
      %p82 = scmp.ne.s32.totalorder %s67, %s81
      %p83 = scmp.eq.s32.totalorder %s22, 0
      %p84 = por %p82, %p83
      %s85 = ssub.s32 %s23, %s35
      %p86 = scmp.eq.s32.totalorder %s85, 0
      %s88 = sadd.s32 %s87, 1
      %s89 = scalar_select %p86, %s87, %s88
      %p92 = pneg %p86
      %p93 = scmp.eq.s32.totalorder %s16, 1
      %p94 = por %p92, %p93
      %p95 = scmp.ne.s32.totalorder %s87, %s90
      %p96 = scmp.eq.s32.totalorder %s16, 0
      %p97 = por %p95, %p96
      %p98 = scmp.ne.s32.totalorder %s87, %s90
      %p99 = scmp.eq.s32.totalorder %s21, 1
      %p100 = por %p98, %p99
      %p101 = scmp.ne.s32.totalorder %s90, %s91
      %p102 = scmp.eq.s32.totalorder %s21, 0
      %p103 = por %p101, %p102
      %p104 = scmp.ne.s32.totalorder %s90, %s91
      %p105 = scmp.eq.s32.totalorder %s22, 1
      %p106 = por %p104, %p105
      %p108 = scmp.ne.s32.totalorder %s91, %s107
      %p109 = scmp.eq.s32.totalorder %s22, 0
      %p110 = por %p108, %p109
      %s111 = ssub.s32 %s23, %s35
      %s112 = ssub.s32 %s24, %s31
      %s113 = sor.u32 %s111, %s112
      %p114 = scmp.eq.s32.totalorder %s113, 0
      %s116 = sadd.s32 %s115, 1
      %s117 = scalar_select %p114, %s115, %s116
      %p120 = pneg %p114
      %p121 = scmp.eq.s32.totalorder %s16, 1
      %p122 = por %p120, %p121
      %p123 = scmp.ne.s32.totalorder %s115, %s118
      %p124 = scmp.eq.s32.totalorder %s16, 0
      %p125 = por %p123, %p124
      %p126 = scmp.ne.s32.totalorder %s115, %s118
      %p127 = scmp.eq.s32.totalorder %s21, 1
      %p128 = por %p126, %p127
      %p129 = scmp.ne.s32.totalorder %s118, %s119
      %p130 = scmp.eq.s32.totalorder %s21, 0
      %p131 = por %p129, %p130
      %p132 = scmp.ne.s32.totalorder %s118, %s119
      %p133 = scmp.eq.s32.totalorder %s22, 1
      %p134 = por %p132, %p133
      %p136 = scmp.ne.s32.totalorder %s119, %s135
      %p137 = scmp.eq.s32.totalorder %s22, 0
      %p138 = por %p136, %p137
      %p139 = scmp.le.s32.totalorder 1, %s16
      %p140 = scmp.lt.s32.totalorder %s16, 3
      %p141 = pnand %p139, %p140
      %p142 = pneg %p141
      // Predicated region
      $region9: #{tpu_custom_call.1} parent=5 // pred_check
        _
      $region10: #{tpu_custom_call.1} parent=5 // pred_check_branch
        %144 = sbr.rel (%p141) target = $region12
      $region11: #{tpu_custom_call.1} parent=5 // pred_region
        %s145 = ssub.s32 %s16, 1
        // Predicated region
        $region13: #{tpu_custom_call.1} parent=11 // pred_check
          %p146 = pneg %p77
        $region14: #{tpu_custom_call.1} parent=11 // pred_check_branch
          %148 = sbr.rel (%p146) target = $region16
        $region15: #{tpu_custom_call.1} parent=11 // pred_region
          %s150 = ssub.s32 256, 256
          %151 = vsyncadd [#allocation6], %s150
          %s152 = sshll.u32 [#allocation5], 4
          %s153 = int_to_ptr.vmem [resolvable:$true] %s152
          %158 = dma.hbm_to_vmem [thread:$0]  %s1, 256, %s153, [#allocation6], 128, 128, 8
        $region16: #{tpu_custom_call.1} parent=11 // pred_fallthru
          _
      $region12: #{tpu_custom_call.1} parent=5 // pred_fallthru
        _
      %p159 = scmp.lt.s32.totalorder %s16, 2
      // Predicated region
      $region17: #{tpu_custom_call.1} parent=5 // pred_check
        %p160 = pneg %p159
      $region18: #{tpu_custom_call.1} parent=5 // pred_check_branch
        %162 = sbr.rel (%p160) target = $region20
      $region19: #{tpu_custom_call.1} parent=5 // pred_region
        // Predicated region
        $region21: #{tpu_custom_call.1} parent=19 // pred_check
          %p163 = pneg %p50
        $region22: #{tpu_custom_call.1} parent=19 // pred_check_branch
          %165 = sbr.rel (%p163) target = $region24
        $region23: #{tpu_custom_call.1} parent=19 // pred_region
          %s166 = sand.u32 %s40, 1
          %s167 = scalar_lea.sflag [#allocation3], %s166
          %s168 = sand.u32 %s40, 1
          %s169 = smul.addr %s168, 8
          %s170 = scalar_lea.vmem [#allocation2], %s169
          %s172 = ssub.s32 128, 128
          %173 = vsyncadd %s167, %s172
          %s174 = sadd.s32 %s24, %s23
          %s175 = smul.addr %s174, 128
          %s176 = scalar_lea.hbm %s0, %s175
          %s178 = sshll.u32 %s170, 4
          %s179 = int_to_ptr.vmem [resolvable:$true] %s178
          %181 = dma.hbm_to_vmem [thread:$0]  %s176, 128, %s179, %s167
        $region24: #{tpu_custom_call.1} parent=19 // pred_fallthru
          _
        // Predicated region
        $region25: #{tpu_custom_call.1} parent=19 // pred_check
          %p182 = pneg %p97
        $region26: #{tpu_custom_call.1} parent=19 // pred_check_branch
          %184 = sbr.rel (%p182) target = $region28
        $region27: #{tpu_custom_call.1} parent=19 // pred_region
          %p185 = scmp.lt.s32.totalorder %s23, 1
          %s186 = scalar_select %p185, %s23, 1
          %s187 = scalar_lea.vmem %s2, %s186
        $region28: #{tpu_custom_call.1} parent=19 // pred_fallthru
          _
      $region20: #{tpu_custom_call.1} parent=5 // pred_fallthru
        _
      %p188 = scmp.le.s32.totalorder 1, %s16
      %p189 = scmp.lt.s32.totalorder %s16, 3
      %p190 = pnand %p188, %p189
      %p191 = pneg %p190
      // Predicated region
      $region29: #{tpu_custom_call.1} parent=5 // pred_check
        _
      $region30: #{tpu_custom_call.1} parent=5 // pred_check_branch
        %193 = sbr.rel (%p190) target = $region32
      $region31: #{tpu_custom_call.1} parent=5 // pred_region
        %s194 = ssub.s32 %s16, 1
        %s195 = sand.u32 %s43, 1
        %s196 = scalar_lea.sflag [#allocation3], %s195
        %s197 = sand.u32 %s43, 1
        %s198 = smul.addr %s197, 8
        %s199 = scalar_lea.vmem [#allocation2], %s198
        // Predicated region
        $region33: #{tpu_custom_call.1} parent=31 // pred_check
          %p200 = pneg %p56
        $region34: #{tpu_custom_call.1} parent=31 // pred_check_branch
          %202 = sbr.rel (%p200) target = $region36
        $region35: #{tpu_custom_call.1} parent=31 // pred_region
          %203 = dma.done %s196, 128
        $region36: #{tpu_custom_call.1} parent=31 // pred_fallthru
          _
        // Predicated region
        $region37: #{tpu_custom_call.1} parent=31 // pred_check
          %p204 = pneg %p77
        $region38: #{tpu_custom_call.1} parent=31 // pred_check_branch
          %206 = sbr.rel (%p204) target = $region40
        $region39: #{tpu_custom_call.1} parent=31 // pred_region
          %207 = dma.done [#allocation6], 256
        $region40: #{tpu_custom_call.1} parent=31 // pred_fallthru
          _
        %s208 = sand.u32 %s43, 1
        %s209 = scalar_lea.sflag [#allocation3], %s208
        %s210 = sand.u32 %s43, 1
        %s211 = smul.addr %s210, 8
        %s212 = scalar_lea.vmem [#allocation2], %s211
        %p213 = pneg %p56
        %p214 = pneg %p53
        %p215 = pneg %p77
        %p216 = pneg %p74
        %p217 = scmp.lt.s32.totalorder %s25, 1
        %s218 = scalar_select %p217, %s25, 1
        %s219 = scalar_lea.vmem %s2, %s218
        %p220 = pneg %p103
        %p221 = pneg %p100
        %p222 = pneg %p131
        %p223 = pneg %p128
        %s224 = sand.u32 %s118, 1
        %s225 = scalar_lea.sflag [#allocation4], %s224
        %s226 = sand.u32 %s118, 1
        %s227 = smul.addr %s226, 8
        %s228 = scalar_lea.vmem [#allocation7], %s227
        %p229 = scmp.lt.s32.totalorder %s25, 1
        %s230 = scalar_select %p229, %s25, 1
        %s231 = scalar_lea.vmem %s2, %s230
        %v232 = vld [vmem:[%s199] sm:$0xff]
        %v233 = vld [vmem:[#allocation5] sm:$0xff]
        %v234 = vld [vmem:[#allocation5 + $0x8] sm:$0x3]
        %v235 = vld [vmem:[%s231] sm:$0x1]
        %v237 = vlaneseq
        %v238 = vshrl.u32 %v237, 7
        %v239 = vsub.s32 0, %v238
        %v240 = vrot.slane %v235, %v239
        %vm242 = vcmask 80896
        %v244 = vsel %vm242, %v232, 0
        %vm246 = vcmask 1041408
        %v248 = vsel %vm246, %v234, 0
        %250 = vmatprep.subr.mxu0 0.0
        %251 = vmatpush1.msra.mxu0 %v233
        %252 = vmatprep.subr.mxu0 0.0
        %253 = vmatpush1.msra.mxu0 %v248
        %254 = vmatprep.subr.mxu0 0.0
        %255 = vmatpush1.msra.mxu0 0.0
        %256 = vmatprep.subr.mxu0 0.0
        %257 = vmatpush1.msra.mxu0 0.0
        %258 = vmatprep.subr.mxu0 0.0
        %259 = vmatpush1.msra.mxu0 0.0
        %260 = vmatprep.subr.mxu0 0.0
        %261 = vmatpush1.msra.mxu0 0.0
        %262 = vmatprep.subr.mxu0 0.0
        %263 = vmatpush1.msra.mxu0 0.0
        %264 = vmatprep.subr.mxu0 0.0
        %265 = vmatpush1.msra.mxu0 0.0
        %266 = vmatprep.subr.mxu0 0.0
        %267 = vmatpush1.msra.mxu0 0.0
        %268 = vmatprep.subr.mxu0 0.0
        %269 = vmatpush1.msra.mxu0 0.0
        %270 = vmatprep.subr.mxu0 0.0
        %271 = vmatpush1.msra.mxu0 0.0
        %272 = vmatprep.subr.mxu0 0.0
        %273 = vmatpush1.msra.mxu0 0.0
        %274 = vmatprep.subr.mxu0 0.0
        %275 = vmatpush1.msra.mxu0 0.0
        %276 = vmatprep.subr.mxu0 0.0
        %277 = vmatpush1.msra.mxu0 0.0
        %278 = vmatprep.subr.mxu0 0.0
        %279 = vmatpush1.msra.mxu0 0.0
        %280 = vmatprep.subr.mxu0 0.0
        %281 = vmatpush1.msra.mxu0 0.0
        %282 = vmatprep.subr.mxu0 0.0
        %283 = vmatpush1.msra.mxu0 0.0
        %284 = vmatprep.subr.mxu0 0.0
        %285 = vmatpush1.msra.mxu0 0.0
        %286 = vmatprep.subr.mxu0 0.0
        %287 = vmatpush1.msra.mxu0 0.0
        %288 = vmatprep.subr.mxu0 0.0
        %289 = vmatpush1.msra.mxu0 0.0
        %290 = vmatprep.subr.mxu0 0.0
        %291 = vmatpush1.msra.mxu0 0.0
        %292 = vmatprep.subr.mxu0 0.0
        %293 = vmatpush1.msra.mxu0 0.0
        %294 = vmatprep.subr.mxu0 0.0
        %295 = vmatpush1.msra.mxu0 0.0
        %296 = vmatprep.subr.mxu0 0.0
        %297 = vmatpush1.msra.mxu0 0.0
        %298 = vmatprep.subr.mxu0 0.0
        %299 = vmatpush1.msra.mxu0 0.0
        %300 = vmatprep.subr.mxu0 0.0
        %301 = vmatpush1.msra.mxu0 0.0
        %302 = vmatprep.subr.mxu0 0.0
        %303 = vmatpush1.msra.mxu0 0.0
        %304 = vmatprep.subr.mxu0 0.0
        %305 = vmatpush1.msra.mxu0 0.0
        %306 = vmatprep.subr.mxu0 0.0
        %307 = vmatpush1.msra.mxu0 0.0
        %308 = vmatprep.subr.mxu0 0.0
        %309 = vmatpush1.msra.mxu0 0.0
        %310 = vmatprep.subr.mxu0 0.0
        %311 = vmatpush1.msra.mxu0 0.0
        %312 = vmatprep.subr.mxu0 0.0
        %313 = vmatpush1.msra.mxu0 0.0
        %314 = vmatprep.mubr.f32.mxu0 0.0
        %315 = vmatmul.mubr.f32.gmra.mrb[0].mxu0 %v244
        %v316 = vpop.f32.mrb[0].mxu0
        %v317 = vadd.f32 %v240, %v316
        %v318 = vpop.f32.mrb[0].mxu0
        %319 = vdwg.mxu0
        %vm320 = vcmask 326656
        %321 = vst.msk [vmem:[%s228] sm:$0xff] %vm320, %v317
        %s322 = sand.u32 %s118, 1
        %s323 = scalar_lea.sflag [#allocation4], %s322
        %s324 = sand.u32 %s118, 1
        %s325 = smul.addr %s324, 8
        %s326 = scalar_lea.vmem [#allocation7], %s325
        // Predicated region
        $region41: #{tpu_custom_call.1} parent=31 // pred_check
          %p327 = pneg %p128
        $region42: #{tpu_custom_call.1} parent=31 // pred_check_branch
          %329 = sbr.rel (%p327) target = $region44
        $region43: #{tpu_custom_call.1} parent=31 // pred_region
          %s331 = ssub.s32 128, 128
          %332 = vsyncadd %s323, %s331
          %s333 = sadd.s32 %s26, %s25
          %s334 = smul.addr %s333, 128
          %s335 = scalar_lea.hbm %s3, %s334
          %s337 = sshll.u32 %s326, 4
          %s338 = int_to_ptr.vmem [resolvable:$true] %s337
          %340 = dma.vmem_to_hbm [thread:$0]  %s338, 128, %s335, %s323
        $region44: #{tpu_custom_call.1} parent=31 // pred_fallthru
          _
      $region32: #{tpu_custom_call.1} parent=5 // pred_fallthru
        _
      %p341 = scmp.le.s32.totalorder 2, %s16
      // Predicated region
      $region45: #{tpu_custom_call.1} parent=5 // pred_check
        %p342 = pneg %p341
      $region46: #{tpu_custom_call.1} parent=5 // pred_check_branch
        %344 = sbr.rel (%p342) target = $region48
      $region47: #{tpu_custom_call.1} parent=5 // pred_region
        %s345 = ssub.s32 %s16, 2
        // Predicated region
        $region49: #{tpu_custom_call.1} parent=47 // pred_check
          %p346 = pneg %p134
        $region50: #{tpu_custom_call.1} parent=47 // pred_check_branch
          %348 = sbr.rel (%p346) target = $region52
        $region51: #{tpu_custom_call.1} parent=47 // pred_region
          %s349 = sand.u32 %s119, 1
          %s350 = scalar_lea.sflag [#allocation4], %s349
          %s351 = sand.u32 %s119, 1
          %s352 = smul.addr %s351, 8
          %s353 = scalar_lea.vmem [#allocation7], %s352
          %354 = dma.done %s350, 128
        $region52: #{tpu_custom_call.1} parent=47 // pred_fallthru
          _
      $region48: #{tpu_custom_call.1} parent=5 // pred_fallthru
        _
    $region6: #{tpu_custom_call.1} parent=1 // loop_footer
      %s20 = sadd.s32 1, %s16
    $region7: #{tpu_custom_call.1} parent=1 // loop_footer_branch
      %15 = sbr.rel target = $region3
    $region8: #{tpu_custom_call.1} parent=1 // loop_exit
      _
    %355 = vsyncpa [#allocation3], 1
    %s356 = scalar_lea.sflag [#allocation3], 1
    %357 = vsyncpa %s356, 1
    %358 = vsyncpa [#allocation6], 1
    %359 = vsyncpa [#allocation4], 1
    %s360 = scalar_lea.sflag [#allocation4], 1
    %361 = vsyncpa %s360, 1

</llo_original>
